<compile_context>
chip_gen: v7x
topology: tpu7x:2x2x1
jax: 0.10.0
libtpu: 0.0.40
codegen_flags: <defaults>
</compile_context>

<pallas_src>
import functools

import jax
import jax.numpy as jnp
from jax.experimental import pallas as pl
from jax.experimental.pallas import tpu as pltpu

block_size = 256   # max context (mask size in the reference module)
n_embd = 384       # C in the forward pass (hard-coded by the module)


def _head_kernel(x_ref, wqkv_ref, o_ref, *, seq_len, hs_pad):
    bt = x_ref.shape[0]                         # batch elements in this block
    T = seq_len

    # Fused QKV projection: one (bt*T, C) @ (C, 3*hs_pad) MXU matmul,
    # bf16 inputs, f32 accumulation. 1/sqrt(C) is folded into the q weight.
    x = x_ref[...].reshape(bt * T, -1).astype(jnp.bfloat16)
    qkv = jnp.dot(x, wqkv_ref[...], preferred_element_type=jnp.float32)

    # 128-wide, tile-aligned slices taken while still 2-D (no lane relayout);
    # the zero-padded head columns contribute exactly 0 to the dot products.
    q = qkv[:, :hs_pad].astype(jnp.bfloat16).reshape(bt, T, hs_pad)
    k = qkv[:, hs_pad:2 * hs_pad].astype(jnp.bfloat16).reshape(bt, T, hs_pad)
    v = qkv[:, 2 * hs_pad:].astype(jnp.bfloat16).reshape(bt, T, hs_pad)

    # scores[b, i, j] = q[b, i, :] . k[b, j, :] (contraction on the head dim,
    # no explicit transpose feeding the MXU).
    s = jnp.einsum('bqd,bkd->bqk', q, k, preferred_element_type=jnp.float32)

    # Causal mask: one (1, T, T) comparison, broadcast over the batch dim.
    row = jax.lax.broadcasted_iota(jnp.int32, (1, T, T), 1)
    col = jax.lax.broadcasted_iota(jnp.int32, (1, T, T), 2)
    s = jnp.where(col <= row, s, -jnp.inf)

    # Numerically stable softmax, with the normalization applied AFTER the PV
    # matmul (hs-wide broadcast instead of T-wide; no (bt,T,T) `wei` temp).
    m = jnp.max(s, axis=-1, keepdims=True)
    p = jnp.exp(s - m)
    denom = jnp.sum(p, axis=-1, keepdims=True)

    # TODO(synk): nn.Dropout(0.2) on the attention weights is identity in eval
    # mode; training dropout would need pltpu.prng_seed + stateful_bernoulli.

    out = jnp.einsum('bqk,bkd->bqd', p.astype(jnp.bfloat16), v,
                     preferred_element_type=jnp.float32)
    out = out * pl.reciprocal(denom, approx=True)      # EUP, ~free slot
    o_ref[...] = out.astype(o_ref.dtype)               # full-lane (hs_pad) store


def _vmem_limit_bytes():
    """Generation-aware scoped-VMEM limit (v7x: 64 MiB physical, v5e/v6e: 128)."""
    try:
        physical = int(pltpu.get_tpu_info().vmem_capacity_bytes)
    except Exception:
        physical = 64 * 1024 * 1024          # conservative fallback (v7x-sized)
    return min(int(physical * 0.75), 100 * 1024 * 1024)


def _pick_batch_tile(B, T, C, hs_pad):
    """Largest batch tile whose per-step footprint fits the budget while keeping
    >= 2 grid steps so both v7x TensorCores get work."""
    vmem_limit = _vmem_limit_bytes()
    budget = int(vmem_limit * 0.7)           # headroom for compiler temporaries

    def step_bytes(bt):
        x_db = 2 * bt * T * C * 4                      # double-buffered f32 input
        o_db = 2 * bt * T * hs_pad * 4                 # double-buffered f32 output
        w_buf = 2 * C * 3 * hs_pad * 2                 # resident bf16 fused weight
        x_bf16 = bt * T * C * 2                        # bf16 copy of x
        qkv = bt * T * 3 * hs_pad * (4 + 2)            # f32 result + bf16 q/k/v
        scores = bt * T * T * (4 + 4 + 2)              # s(f32) + p(f32) + p(bf16)
        mask = 3 * T * T * 4                           # iotas + bool mask
        out_f32 = bt * T * hs_pad * 4
        return x_db + o_db + w_buf + x_bf16 + qkv + scores + mask + out_f32

    best = 1
    for bt in range(1, B + 1):
        if B % bt:
            continue
        if step_bytes(bt) > budget:
            break
        if B == 1 or B // bt >= 2:
            best = bt
    # TODO(synk): if even bt=1 exceeds the budget (huge T), flash-style blocking
    # over T with online softmax would be required; unnecessary at T <= 256.
    return best, vmem_limit


def head_forward(x, w_key, w_query, w_value):
    """x: (B, T, C);  w_*: (C, head_size) = nn.Linear weight transposed."""
    B, T, C = x.shape
    hs = w_key.shape[1]
    scale = float(C) ** -0.5
    hs_pad = ((hs + 127) // 128) * 128       # lane-dense / tile-aligned head dim

    def pad(w):
        return jnp.pad(w, ((0, 0), (0, hs_pad - hs)))

    # Fused weight [Wq*scale | 0 | Wk | 0 | Wv | 0], each segment 128-aligned.
    w_qkv = jnp.concatenate([pad(w_query * scale), pad(w_key), pad(w_value)],
                            axis=1).astype(jnp.bfloat16)

    bt, vmem_limit = _pick_batch_tile(B, T, C, hs_pad)
    grid = (B // bt,)

    kernel = functools.partial(_head_kernel, seq_len=T, hs_pad=hs_pad)

    out_pad = pl.pallas_call(
        kernel,
        out_shape=jax.ShapeDtypeStruct((B, T, hs_pad), x.dtype),
        grid_spec=pltpu.PrefetchScalarGridSpec(
            num_scalar_prefetch=0,
            grid=grid,
            in_specs=[
                pl.BlockSpec((bt, T, C), lambda b: (b, 0, 0)),
                pl.BlockSpec((C, 3 * hs_pad), lambda b: (0, 0)),
            ],
            out_specs=pl.BlockSpec((bt, T, hs_pad), lambda b: (b, 0, 0)),
        ),
        compiler_params=pltpu.CompilerParams(
            dimension_semantics=("parallel",),
            vmem_limit_bytes=vmem_limit),
    )(x, w_qkv)

    return out_pad[:, :, :hs]


def head_forward_ref(x, w_key, w_query, w_value):
    """Pure-JAX reference mirroring the PyTorch forward (eval mode), exact f32."""
    B, T, C = x.shape
    hp = jax.lax.Precision.HIGHEST
    k = jnp.einsum('btc,ch->bth', x, w_key, precision=hp)
    q = jnp.einsum('btc,ch->bth', x, w_query, precision=hp)
    v = jnp.einsum('btc,ch->bth', x, w_value, precision=hp)
    wei = jnp.einsum('bqh,bkh->bqk', q, k, precision=hp) * (float(C) ** -0.5)
    tril = jnp.tril(jnp.ones((T, T), dtype=bool))
    wei = jnp.where(tril, wei, -jnp.inf)
    wei = jax.nn.softmax(wei, axis=-1)
    return jnp.einsum('bqk,bkh->bqh', wei, v, precision=hp)


if __name__ == "__main__":
    B, T, C = 4, 32, n_embd     # T <= block_size; exercises a 2-step grid (bt=2)
    head_size = 64

    key = jax.random.PRNGKey(0)
    kx, kk, kq, kv = jax.random.split(key, 4)

    x = jax.random.normal(kx, (B, T, C), dtype=jnp.float32)
    # nn.Linear(n_embd, head_size, bias=False) weight is (head_size, n_embd);
    # we store its transpose (n_embd, head_size) so the kernel computes x @ W.
    bound = 1.0 / (C ** 0.5)
    w_key = jax.random.uniform(kk, (C, head_size), jnp.float32, -bound, bound)
    w_query = jax.random.uniform(kq, (C, head_size), jnp.float32, -bound, bound)
    w_value = jax.random.uniform(kv, (C, head_size), jnp.float32, -bound, bound)

    out = jax.block_until_ready(head_forward(x, w_key, w_query, w_value))

    ref = head_forward_ref(x, w_key, w_query, w_value)
    assert out.shape == (B, T, head_size)
    max_err = float(jnp.max(jnp.abs(out - ref)))
    # bf16 MXU inputs with f32 accumulation + approx reciprocal -> ~1e-2 error.
    assert jnp.allclose(out, ref, atol=3e-2, rtol=3e-2), f"max abs err {max_err}"

    print("KERNEL_OK")
</pallas_src>

<mosaic_0001>
module attributes {stable_mosaic.version = 11 : i64} {
  func.func @_head_kernel(%arg0: i32, %arg1: memref<2x32x384xf32, #tpu.memory_space<vmem>>, %arg2: memref<384x384xbf16, #tpu.memory_space<vmem>>, %arg3: memref<2x32x128xf32, #tpu.memory_space<vmem>>) attributes {dimension_semantics = [#tpu.dimension_semantics<parallel>], iteration_bounds = array<i64: 2>, scalar_prefetch = 0 : i64, scratch_operands = 0 : i64, tpu.core_type = #tpu.core_type<tc>, window_params = [{transform_indices = @transform_0, window_bounds = array<i64: 2, 32, 384>}, {pipeline_mode = #tpu.pipeline_mode<synchronous>, transform_indices = @transform_1, window_bounds = array<i64: 384, 384>}, {transform_indices = @transform_2, window_bounds = array<i64: 2, 32, 128>}]} {
    %c0 = arith.constant 0 : index
    %c0_0 = arith.constant 0 : index
    %c0_1 = arith.constant 0 : index
    %0 = vector.load %arg1[%c0, %c0_0, %c0_1] : memref<2x32x384xf32, #tpu.memory_space<vmem>>, vector<2x32x384xf32>
    %1 = vector.shape_cast %0 : vector<2x32x384xf32> to vector<64x384xf32>
    %2 = arith.truncf %1 : vector<64x384xf32> to vector<64x384xbf16>
    %c0_2 = arith.constant 0 : index
    %c0_3 = arith.constant 0 : index
    %3 = vector.load %arg2[%c0_2, %c0_3] : memref<384x384xbf16, #tpu.memory_space<vmem>>, vector<384x384xbf16>
    %cst = arith.constant dense<0.000000e+00> : vector<64x384xf32>
    %4 = tpu.matmul %2, %3, %cst {dimension_numbers = #tpu.dot_dimension_numbers<[1], [0], [0], [1], [0, 0, 1, 1], [], []>} : vector<64x384xbf16>, vector<384x384xbf16>, vector<64x384xf32> -> vector<64x384xf32>
    %5 = vector.extract_strided_slice %4 {offsets = [0, 0], sizes = [64, 128], strides = [1, 1]} : vector<64x384xf32> to vector<64x128xf32>
    %6 = arith.truncf %5 : vector<64x128xf32> to vector<64x128xbf16>
    %7 = vector.shape_cast %6 : vector<64x128xbf16> to vector<2x32x128xbf16>
    %8 = vector.extract_strided_slice %4 {offsets = [0, 128], sizes = [64, 128], strides = [1, 1]} : vector<64x384xf32> to vector<64x128xf32>
    %9 = arith.truncf %8 : vector<64x128xf32> to vector<64x128xbf16>
    %10 = vector.shape_cast %9 : vector<64x128xbf16> to vector<2x32x128xbf16>
    %11 = vector.extract_strided_slice %4 {offsets = [0, 256], sizes = [64, 128], strides = [1, 1]} : vector<64x384xf32> to vector<64x128xf32>
    %12 = arith.truncf %11 : vector<64x128xf32> to vector<64x128xbf16>
    %13 = vector.shape_cast %12 : vector<64x128xbf16> to vector<2x32x128xbf16>
    "tpu.trace_start"() <{level = 10 : i32, message = "bqd,bkd->bqk"}> : () -> ()
    %cst_4 = arith.constant dense<0.000000e+00> : vector<2x32x32xf32>
    %14 = tpu.matmul %7, %10, %cst_4 {dimension_numbers = #tpu.dot_dimension_numbers<[2], [2], [1], [1], [0, 0, 0, 1, 1, 1], [0], [0]>} : vector<2x32x128xbf16>, vector<2x32x128xbf16>, vector<2x32x32xf32> -> vector<2x32x32xf32>
    "tpu.trace_stop"() : () -> ()
    %15 = tpu.iota {dimensions = array<i32: 1>} : vector<1x32x32xi32>
    %16 = tpu.iota {dimensions = array<i32: 2>} : vector<1x32x32xi32>
    %17 = arith.cmpi sle, %16, %15 : vector<1x32x32xi32>
    %cst_5 = arith.constant 0xFF800000 : f32
    %18 = vector.shape_cast %17 : vector<1x32x32xi1> to vector<1x32x32xi1>
    %19 = vector.broadcast %18 : vector<1x32x32xi1> to vector<2x32x32xi1>
    %20 = vector.broadcast %cst_5 : f32 to vector<2x32x32xf32>
    %21 = arith.select %19, %14, %20 : vector<2x32x32xi1>, vector<2x32x32xf32>
    %cst_6 = arith.constant dense<0xFF800000> : vector<2x32xf32>
    %22 = vector.multi_reduction <maximumf>, %21, %cst_6 [2] : vector<2x32x32xf32> to vector<2x32xf32>
    %23 = vector.shape_cast %22 : vector<2x32xf32> to vector<2x32x1xf32>
    %24 = vector.broadcast %23 : vector<2x32x1xf32> to vector<2x32x32xf32>
    %25 = arith.subf %21, %24 : vector<2x32x32xf32>
    %26 = math.exp %25 : vector<2x32x32xf32>
    %cst_7 = arith.constant dense<0.000000e+00> : vector<2x32xf32>
    %27 = vector.multi_reduction <add>, %26, %cst_7 [2] : vector<2x32x32xf32> to vector<2x32xf32>
    %28 = vector.shape_cast %27 : vector<2x32xf32> to vector<2x32x1xf32>
    %29 = arith.truncf %26 : vector<2x32x32xf32> to vector<2x32x32xbf16>
    "tpu.trace_start"() <{level = 10 : i32, message = "bqk,bkd->bqd"}> : () -> ()
    %cst_8 = arith.constant dense<0.000000e+00> : vector<2x32x128xf32>
    %30 = tpu.matmul %29, %13, %cst_8 {dimension_numbers = #tpu.dot_dimension_numbers<[2], [1], [1], [2], [0, 0, 0, 1, 1, 2], [0], [0]>} : vector<2x32x32xbf16>, vector<2x32x128xbf16>, vector<2x32x128xf32> -> vector<2x32x128xf32>
    "tpu.trace_stop"() : () -> ()
    %31 = tpu.reciprocal %28 {approx = true} : vector<2x32x1xf32> -> vector<2x32x1xf32>
    %32 = vector.broadcast %31 : vector<2x32x1xf32> to vector<2x32x128xf32>
    %33 = arith.mulf %30, %32 : vector<2x32x128xf32>
    %c0_9 = arith.constant 0 : index
    %c0_10 = arith.constant 0 : index
    %c0_11 = arith.constant 0 : index
    %34 = vector.load %arg3[%c0_9, %c0_10, %c0_11] : memref<2x32x128xf32, #tpu.memory_space<vmem>>, vector<2x32x128xf32>
    tpu.vector_store %arg3[%c0_9, %c0_10, %c0_11], %33 {strides = array<i32>} : memref<2x32x128xf32, #tpu.memory_space<vmem>>, vector<2x32x128xf32>,
    return
  }
  func.func @transform_0(%arg0: i32) -> (i32, i32, i32) {
    %c0_i32 = arith.constant 0 : i32
    %c0_i32_0 = arith.constant 0 : i32
    %c0_i32_1 = arith.constant 0 : i32
    return %arg0, %c0_i32, %c0_i32_0 : i32, i32, i32
  }
  func.func @transform_1(%arg0: i32) -> (i32, i32) {
    %c0_i32 = arith.constant 0 : i32
    %c0_i32_0 = arith.constant 0 : i32
    %c0_i32_1 = arith.constant 0 : i32
    return %c0_i32, %c0_i32_0 : i32, i32
  }
  func.func @transform_2(%arg0: i32) -> (i32, i32, i32) {
    %c0_i32 = arith.constant 0 : i32
    %c0_i32_0 = arith.constant 0 : i32
    %c0_i32_1 = arith.constant 0 : i32
    return %arg0, %c0_i32, %c0_i32_0 : i32, i32, i32
  }
}

</mosaic_0001>

<llo_original>
// kernel: tpu_custom_call.1
$region0: #{tpu_custom_call.1}
  #allocation0 [shape = 'u32[]', space=smem, size = 0x4, offset = 0x4, fixed_abs, tag = 'smem constant byte address 0x4 - core index']
  #allocation1 [shape = 'u32[144,128]{1,0:T(1,128)}', space=vmem, size = 0x12000, scoped, tag = 'internal scratch']
  %s0 = inlined_call_operand.hbm [shape: f32[4,32,384], index: 0, kind: input, shape index: {}]
  %s1 = inlined_call_operand.hbm [shape: bf16[384,384], index: 1, kind: input, shape index: {}]
  %s2 = inlined_call_operand.hbm [shape: f32[4,32,128], index: 2, kind: output, shape index: {}]
  %s3 = sld [smem:[#allocation0]]
  $region49: #{tpu_custom_call.1} parent=0
    _
  %s5 = ssub.s32 1, %s3
  %s6 = scalar_select 0, %s5, %s3
  $region1: #{tpu_custom_call.1} parent=0
    #allocation2 [shape = 'u8[196608]{0}', space=vmem, size = 0x30000, scoped, tag = 'input window, operand 0']
    #allocation3 [shape = 's32[2]{0}', space=sflag, size = 0x8, scoped, tag = 'scoped memory for tpu_custom_call.1']
    #allocation4 [shape = 's32[2]{0}', space=sflag, size = 0x8, scoped, tag = 'scoped memory for tpu_custom_call.1']
    #allocation5 [shape = 'u8[294912]{0}', space=vmem, size = 0x48000, scoped, tag = 'input window, operand 1, single buffered']
    #allocation6 [shape = 's32[1]{0}', space=sflag, size = 0x4, scoped, tag = 'scoped memory for tpu_custom_call.1']
    #allocation7 [shape = 'u8[65536]{0}', space=vmem, size = 0x10000, scoped, tag = 'output window, operand 0']
    %7 = vsyncpa [#allocation3], 0
    %s8 = scalar_lea.sflag [#allocation3], 1
    %9 = vsyncpa %s8, 0
    %10 = vsyncpa [#allocation6], 0
    %11 = vsyncpa [#allocation4], 0
    %s12 = scalar_lea.sflag [#allocation4], 1
    %13 = vsyncpa %s12, 0
    loop: start=0, step=1, limit=4
    $region2: #{tpu_custom_call.1} parent=1 // loop_pre_header
      _
    $region3: #{tpu_custom_call.1} parent=1 // loop_header
      %s15 = sphi 0, %s19
      %p16 = scmp.ge.s32.totalorder %s15, 4
      %s25 = sphi 0, %s27
      %s28 = sphi 0, %s25
      %s29 = sphi 0, %s28
      %s45 = sphi 0, %s29
      %s49 = sphi 0, %s49
      %s51 = sphi 0, %s49
      %s52 = sphi 0, %s51
      %s66 = sphi 0, %s52
      %s72 = sphi 0, %s74
      %s75 = sphi 0, %s72
      %s76 = sphi 0, %s75
      %s92 = sphi 0, %s76
    $region4: #{tpu_custom_call.1} parent=1 // loop_header_branch
      %18 = sbr.rel (%p16) target = $region8
    $region5: #{tpu_custom_call.1} parent=1 // loop_body
      %s20 = ssub.s32 %s15, 1
      %s21 = ssub.s32 %s15, 2
      %s22 = sadd.s32 %s15, 1
      %s23 = ssub.s32 %s15, %s22
      %p24 = scmp.eq.s32.totalorder %s23, 0
      %s26 = sadd.s32 %s25, 1
      %s27 = scalar_select %p24, %s25, %s26
      %p30 = pneg %p24
      %p31 = scmp.eq.s32.totalorder %s15, 1
      %p32 = por %p30, %p31
      %p33 = scmp.ne.s32.totalorder %s25, %s28
      %p34 = scmp.eq.s32.totalorder %s15, 0
      %p35 = por %p33, %p34
      %p36 = scmp.ne.s32.totalorder %s25, %s28
      %p37 = scmp.eq.s32.totalorder %s20, 1
      %p38 = por %p36, %p37
      %p39 = scmp.ne.s32.totalorder %s28, %s29
      %p40 = scmp.eq.s32.totalorder %s20, 0
      %p41 = por %p39, %p40
      %p42 = scmp.ne.s32.totalorder %s28, %s29
      %p43 = scmp.eq.s32.totalorder %s21, 1
      %p44 = por %p42, %p43
      %p46 = scmp.ne.s32.totalorder %s29, %s45
      %p47 = scmp.eq.s32.totalorder %s21, 0
      %p48 = por %p46, %p47
      %s50 = sadd.s32 %s49, 1
      %p53 = scmp.eq.s32.totalorder %s15, 1
      %p54 = scmp.ne.s32.totalorder %s49, %s51
      %p55 = scmp.eq.s32.totalorder %s15, 0
      %p56 = por %p54, %p55
      %p57 = scmp.ne.s32.totalorder %s49, %s51
      %p58 = scmp.eq.s32.totalorder %s20, 1
      %p59 = por %p57, %p58
      %p60 = scmp.ne.s32.totalorder %s51, %s52
      %p61 = scmp.eq.s32.totalorder %s20, 0
      %p62 = por %p60, %p61
      %p63 = scmp.ne.s32.totalorder %s51, %s52
      %p64 = scmp.eq.s32.totalorder %s21, 1
      %p65 = por %p63, %p64
      %p67 = scmp.ne.s32.totalorder %s52, %s66
      %p68 = scmp.eq.s32.totalorder %s21, 0
      %p69 = por %p67, %p68
      %s70 = ssub.s32 %s15, %s22
      %p71 = scmp.eq.s32.totalorder %s70, 0
      %s73 = sadd.s32 %s72, 1
      %s74 = scalar_select %p71, %s72, %s73
      %p77 = pneg %p71
      %p78 = scmp.eq.s32.totalorder %s15, 1
      %p79 = por %p77, %p78
      %p80 = scmp.ne.s32.totalorder %s72, %s75
      %p81 = scmp.eq.s32.totalorder %s15, 0
      %p82 = por %p80, %p81
      %p83 = scmp.ne.s32.totalorder %s72, %s75
      %p84 = scmp.eq.s32.totalorder %s20, 1
      %p85 = por %p83, %p84
      %p86 = scmp.ne.s32.totalorder %s75, %s76
      %p87 = scmp.eq.s32.totalorder %s20, 0
      %p88 = por %p86, %p87
      %p89 = scmp.ne.s32.totalorder %s75, %s76
      %p90 = scmp.eq.s32.totalorder %s21, 1
      %p91 = por %p89, %p90
      %p93 = scmp.ne.s32.totalorder %s76, %s92
      %p94 = scmp.eq.s32.totalorder %s21, 0
      %p95 = por %p93, %p94
      %p96 = scmp.le.s32.totalorder 1, %s15
      %p97 = scmp.lt.s32.totalorder %s15, 3
      %p98 = pnand %p96, %p97
      %p99 = pneg %p98
      // Predicated region
      $region9: #{tpu_custom_call.1} parent=5 // pred_check
        _
      $region10: #{tpu_custom_call.1} parent=5 // pred_check_branch
        %101 = sbr.rel (%p98) target = $region12
      $region11: #{tpu_custom_call.1} parent=5 // pred_region
        %s102 = ssub.s32 %s15, 1
        // Predicated region
        $region13: #{tpu_custom_call.1} parent=11 // pred_check
          %p103 = pneg %p62
        $region14: #{tpu_custom_call.1} parent=11 // pred_check_branch
          %105 = sbr.rel (%p103) target = $region16
        $region15: #{tpu_custom_call.1} parent=11 // pred_region
          %s107 = ssub.s32 9216, 9216
          %108 = vsyncadd [#allocation6], %s107
          %s109 = sshll.u32 [#allocation5], 4
          %s110 = int_to_ptr.vmem [resolvable:$true] %s109
          %115 = dma.hbm_to_vmem [thread:$0]  %s1, 9216, %s110, [#allocation6], 192, 192, 12
        $region16: #{tpu_custom_call.1} parent=11 // pred_fallthru
          _
      $region12: #{tpu_custom_call.1} parent=5 // pred_fallthru
        _
      %p116 = scmp.lt.s32.totalorder %s15, 2
      // Predicated region
      $region17: #{tpu_custom_call.1} parent=5 // pred_check
        %p117 = pneg %p116
      $region18: #{tpu_custom_call.1} parent=5 // pred_check_branch
        %119 = sbr.rel (%p117) target = $region20
      $region19: #{tpu_custom_call.1} parent=5 // pred_region
        // Predicated region
        $region21: #{tpu_custom_call.1} parent=19 // pred_check
          %p120 = pneg %p35
        $region22: #{tpu_custom_call.1} parent=19 // pred_check_branch
          %122 = sbr.rel (%p120) target = $region24
        $region23: #{tpu_custom_call.1} parent=19 // pred_region
          %s123 = sand.u32 %s25, 1
          %s124 = scalar_lea.sflag [#allocation3], %s123
          %s125 = sand.u32 %s25, 1
          %s126 = smul.addr %s125, 192
          %s127 = scalar_lea.vmem [#allocation2], %s126
          %s128 = smul.u32 2, %s15
          %s130 = ssub.s32 3072, 3072
          %131 = vsyncadd %s124, %s130
          %s132 = smul.addr %s128, 12
          %s133 = smul.addr %s132, 128
          %s134 = scalar_lea.hbm %s0, %s133
          %s135 = sshll.u32 %s127, 4
          %s136 = int_to_ptr.vmem [resolvable:$true] %s135
          %141 = dma.hbm_to_vmem [thread:$0]  %s134, 3072, %s136, %s124, 384, 384, 24
        $region24: #{tpu_custom_call.1} parent=19 // pred_fallthru
          _
      $region20: #{tpu_custom_call.1} parent=5 // pred_fallthru
        _
      %p142 = scmp.le.s32.totalorder 1, %s15
      %p143 = scmp.lt.s32.totalorder %s15, 3
      %p144 = pnand %p142, %p143
      %p145 = pneg %p144
      // Predicated region
      $region25: #{tpu_custom_call.1} parent=5 // pred_check
        _
      $region26: #{tpu_custom_call.1} parent=5 // pred_check_branch
        %147 = sbr.rel (%p144) target = $region28
      $region27: #{tpu_custom_call.1} parent=5 // pred_region
        %s148 = ssub.s32 %s15, 1
        %s149 = sand.u32 %s28, 1
        %s150 = scalar_lea.sflag [#allocation3], %s149
        %s151 = sand.u32 %s28, 1
        %s152 = smul.addr %s151, 192
        %s153 = scalar_lea.vmem [#allocation2], %s152
        // Predicated region
        $region29: #{tpu_custom_call.1} parent=27 // pred_check
          %p154 = pneg %p41
        $region30: #{tpu_custom_call.1} parent=27 // pred_check_branch
          %156 = sbr.rel (%p154) target = $region32
        $region31: #{tpu_custom_call.1} parent=27 // pred_region
          %157 = dma.done %s150, 3072
        $region32: #{tpu_custom_call.1} parent=27 // pred_fallthru
          _
        // Predicated region
        $region33: #{tpu_custom_call.1} parent=27 // pred_check
          %p158 = pneg %p62
        $region34: #{tpu_custom_call.1} parent=27 // pred_check_branch
          %160 = sbr.rel (%p158) target = $region36
        $region35: #{tpu_custom_call.1} parent=27 // pred_region
          %161 = dma.done [#allocation6], 9216
        $region36: #{tpu_custom_call.1} parent=27 // pred_fallthru
          _
        %s162 = sand.u32 %s28, 1
        %s163 = scalar_lea.sflag [#allocation3], %s162
        %s164 = sand.u32 %s28, 1
        %s165 = smul.addr %s164, 192
        %s166 = scalar_lea.vmem [#allocation2], %s165
        %p167 = pneg %p41
        %p168 = pneg %p38
        %p169 = pneg %p62
        %p170 = pneg %p59
        %p171 = pneg %p88
        %p172 = pneg %p85
        %s173 = sand.u32 %s75, 1
        %s174 = scalar_lea.sflag [#allocation4], %s173
        %s175 = sand.u32 %s75, 1
        %s176 = smul.addr %s175, 64
        %s177 = scalar_lea.vmem [#allocation7], %s176
        %s178 = smul.u32 2, %s20
        %s179 = smul.u32 2, %s20
        %v181 = vld [vmem:[%s153] sm:$0xff]
        %v182 = vld [vmem:[%s153 + $0x8] sm:$0xff]
        %v183 = vld [vmem:[%s153 + $0x10] sm:$0xff]
        %v184 = vld [vmem:[%s153 + $0x18] sm:$0xff]
        %v185 = vld [vmem:[%s153 + $0x20] sm:$0xff]
        %v186 = vld [vmem:[%s153 + $0x28] sm:$0xff]
        %v187 = vld [vmem:[%s153 + $0x30] sm:$0xff]
        %v188 = vld [vmem:[%s153 + $0x38] sm:$0xff]
        %v189 = vld [vmem:[%s153 + $0x40] sm:$0xff]
        %v190 = vld [vmem:[%s153 + $0x48] sm:$0xff]
        %v191 = vld [vmem:[%s153 + $0x50] sm:$0xff]
        %v192 = vld [vmem:[%s153 + $0x58] sm:$0xff]
        %v193 = vld [vmem:[%s153 + $0x60] sm:$0xff]
        %v194 = vld [vmem:[%s153 + $0x68] sm:$0xff]
        %v195 = vld [vmem:[%s153 + $0x70] sm:$0xff]
        %v196 = vld [vmem:[%s153 + $0x78] sm:$0xff]
        %v197 = vld [vmem:[%s153 + $0x80] sm:$0xff]
        %v198 = vld [vmem:[%s153 + $0x88] sm:$0xff]
        %v199 = vld [vmem:[%s153 + $0x90] sm:$0xff]
        %v200 = vld [vmem:[%s153 + $0x98] sm:$0xff]
        %v201 = vld [vmem:[%s153 + $0xa0] sm:$0xff]
        %v202 = vld [vmem:[%s153 + $0xa8] sm:$0xff]
        %v203 = vld [vmem:[%s153 + $0xb0] sm:$0xff]
        %v204 = vld [vmem:[%s153 + $0xb8] sm:$0xff]
        %v205 = vpack.c.bf16 %v184, %v181
        %v206 = vpack.c.bf16 %v185, %v182
        %v207 = vpack.c.bf16 %v186, %v183
        %v208 = vpack.c.bf16 %v190, %v187
        %v209 = vpack.c.bf16 %v191, %v188
        %v210 = vpack.c.bf16 %v192, %v189
        %v211 = vpack.c.bf16 %v196, %v193
        %v212 = vpack.c.bf16 %v197, %v194
        %v213 = vpack.c.bf16 %v198, %v195
        %v214 = vpack.c.bf16 %v202, %v199
        %v215 = vpack.c.bf16 %v203, %v200
        %v216 = vpack.c.bf16 %v204, %v201
        %v217 = vld [vmem:[#allocation5] sm:$0xff]
        %v218 = vld [vmem:[#allocation5 + $0x8] sm:$0xf]
        %v219 = vld [vmem:[#allocation5 + $0xc] sm:$0xff]
        %v220 = vld [vmem:[#allocation5 + $0x14] sm:$0xf]
        %v221 = vld [vmem:[#allocation5 + $0x18] sm:$0xff]
        %v222 = vld [vmem:[#allocation5 + $0x20] sm:$0xf]
        %v223 = vld [vmem:[#allocation5 + $0x24] sm:$0xff]
        %v224 = vld [vmem:[#allocation5 + $0x2c] sm:$0xf]
        %v225 = vld [vmem:[#allocation5 + $0x30] sm:$0xff]
        %v226 = vld [vmem:[#allocation5 + $0x38] sm:$0xf]
        %v227 = vld [vmem:[#allocation5 + $0x3c] sm:$0xff]
        %v228 = vld [vmem:[#allocation5 + $0x44] sm:$0xf]
        %v229 = vld [vmem:[#allocation5 + $0x48] sm:$0xff]
        %v230 = vld [vmem:[#allocation5 + $0x50] sm:$0xf]
        %v231 = vld [vmem:[#allocation5 + $0x54] sm:$0xff]
        %v232 = vld [vmem:[#allocation5 + $0x5c] sm:$0xf]
        %v233 = vld [vmem:[#allocation5 + $0x60] sm:$0xff]
        %v234 = vld [vmem:[#allocation5 + $0x68] sm:$0xf]
        %v235 = vld [vmem:[#allocation5 + $0x6c] sm:$0xff]
        %v236 = vld [vmem:[#allocation5 + $0x74] sm:$0xf]
        %v237 = vld [vmem:[#allocation5 + $0x78] sm:$0xff]
        %v238 = vld [vmem:[#allocation5 + $0x80] sm:$0xf]
        %v239 = vld [vmem:[#allocation5 + $0x84] sm:$0xff]
        %v240 = vld [vmem:[#allocation5 + $0x8c] sm:$0xf]
        %v241 = vld [vmem:[#allocation5 + $0x90] sm:$0xff]
        %v242 = vld [vmem:[#allocation5 + $0x98] sm:$0xf]
        %v243 = vld [vmem:[#allocation5 + $0x9c] sm:$0xff]
        %v244 = vld [vmem:[#allocation5 + $0xa4] sm:$0xf]
        %v245 = vld [vmem:[#allocation5 + $0xa8] sm:$0xff]
        %v246 = vld [vmem:[#allocation5 + $0xb0] sm:$0xf]
        %v247 = vld [vmem:[#allocation5 + $0xb4] sm:$0xff]
        %v248 = vld [vmem:[#allocation5 + $0xbc] sm:$0xf]
        %v249 = vld [vmem:[#allocation5 + $0xc0] sm:$0xff]
        %v250 = vld [vmem:[#allocation5 + $0xc8] sm:$0xf]
        %v251 = vld [vmem:[#allocation5 + $0xcc] sm:$0xff]
        %v252 = vld [vmem:[#allocation5 + $0xd4] sm:$0xf]
        %v253 = vld [vmem:[#allocation5 + $0xd8] sm:$0xff]
        %v254 = vld [vmem:[#allocation5 + $0xe0] sm:$0xf]
        %v255 = vld [vmem:[#allocation5 + $0xe4] sm:$0xff]
        %v256 = vld [vmem:[#allocation5 + $0xec] sm:$0xf]
        %v257 = vld [vmem:[#allocation5 + $0xf0] sm:$0xff]
        %v258 = vld [vmem:[#allocation5 + $0xf8] sm:$0xf]
        %v259 = vld [vmem:[#allocation5 + $0xfc] sm:$0xff]
        %v260 = vld [vmem:[#allocation5 + $0x104] sm:$0xf]
        %v261 = vld [vmem:[#allocation5 + $0x108] sm:$0xff]
        %v262 = vld [vmem:[#allocation5 + $0x110] sm:$0xf]
        %v263 = vld [vmem:[#allocation5 + $0x114] sm:$0xff]
        %v264 = vld [vmem:[#allocation5 + $0x11c] sm:$0xf]
        %v265 = vld [vmem:[#allocation5 + $0x120] sm:$0xff]
        %v266 = vld [vmem:[#allocation5 + $0x128] sm:$0xf]
        %v267 = vld [vmem:[#allocation5 + $0x12c] sm:$0xff]
        %v268 = vld [vmem:[#allocation5 + $0x134] sm:$0xf]
        %v269 = vld [vmem:[#allocation5 + $0x138] sm:$0xff]
        %v270 = vld [vmem:[#allocation5 + $0x140] sm:$0xf]
        %v271 = vld [vmem:[#allocation5 + $0x144] sm:$0xff]
        %v272 = vld [vmem:[#allocation5 + $0x14c] sm:$0xf]
        %v273 = vld [vmem:[#allocation5 + $0x150] sm:$0xff]
        %v274 = vld [vmem:[#allocation5 + $0x158] sm:$0xf]
        %v275 = vld [vmem:[#allocation5 + $0x15c] sm:$0xff]
        %v276 = vld [vmem:[#allocation5 + $0x164] sm:$0xf]
        %v277 = vld [vmem:[#allocation5 + $0x168] sm:$0xff]
        %v278 = vld [vmem:[#allocation5 + $0x170] sm:$0xf]
        %v279 = vld [vmem:[#allocation5 + $0x174] sm:$0xff]
        %v280 = vld [vmem:[#allocation5 + $0x17c] sm:$0xf]
        %v281 = vld [vmem:[#allocation5 + $0x180] sm:$0xff]
        %v282 = vld [vmem:[#allocation5 + $0x188] sm:$0xf]
        %v283 = vld [vmem:[#allocation5 + $0x18c] sm:$0xff]
        %v284 = vld [vmem:[#allocation5 + $0x194] sm:$0xf]
        %v285 = vld [vmem:[#allocation5 + $0x198] sm:$0xff]
        %v286 = vld [vmem:[#allocation5 + $0x1a0] sm:$0xf]
        %v287 = vld [vmem:[#allocation5 + $0x1a4] sm:$0xff]
        %v288 = vld [vmem:[#allocation5 + $0x1ac] sm:$0xf]
        %v289 = vld [vmem:[#allocation5 + $0x1b0] sm:$0xff]
        %v290 = vld [vmem:[#allocation5 + $0x1b8] sm:$0xf]
        %v291 = vld [vmem:[#allocation5 + $0x1bc] sm:$0xff]
        %v292 = vld [vmem:[#allocation5 + $0x1c4] sm:$0xf]
        %v293 = vld [vmem:[#allocation5 + $0x1c8] sm:$0xff]
        %v294 = vld [vmem:[#allocation5 + $0x1d0] sm:$0xf]
        %v295 = vld [vmem:[#allocation5 + $0x1d4] sm:$0xff]
        %v296 = vld [vmem:[#allocation5 + $0x1dc] sm:$0xf]
        %v297 = vld [vmem:[#allocation5 + $0x1e0] sm:$0xff]
        %v298 = vld [vmem:[#allocation5 + $0x1e8] sm:$0xf]
        %v299 = vld [vmem:[#allocation5 + $0x1ec] sm:$0xff]
        %v300 = vld [vmem:[#allocation5 + $0x1f4] sm:$0xf]
        %v301 = vld [vmem:[#allocation5 + $0x1f8] sm:$0xff]
        %v302 = vld [vmem:[#allocation5 + $0x200] sm:$0xf]
        %v303 = vld [vmem:[#allocation5 + $0x204] sm:$0xff]
        %v304 = vld [vmem:[#allocation5 + $0x20c] sm:$0xf]
        %v305 = vld [vmem:[#allocation5 + $0x210] sm:$0xff]
        %v306 = vld [vmem:[#allocation5 + $0x218] sm:$0xf]
        %v307 = vld [vmem:[#allocation5 + $0x21c] sm:$0xff]
        %v308 = vld [vmem:[#allocation5 + $0x224] sm:$0xf]
        %v309 = vld [vmem:[#allocation5 + $0x228] sm:$0xff]
        %v310 = vld [vmem:[#allocation5 + $0x230] sm:$0xf]
        %v311 = vld [vmem:[#allocation5 + $0x234] sm:$0xff]
        %v312 = vld [vmem:[#allocation5 + $0x23c] sm:$0xf]
        %v409 = vunpack.c.l.b16 %v217
        %v410 = vunpack.c.h.b16 %v217
        %v411 = vunpack.c.l.b16 %v218
        %v412 = vunpack.c.l.b16 %v219
        %v413 = vunpack.c.h.b16 %v219
        %v414 = vunpack.c.l.b16 %v220
        %v415 = vunpack.c.l.b16 %v221
        %v416 = vunpack.c.h.b16 %v221
        %v417 = vunpack.c.l.b16 %v222
        %v418 = vunpack.c.l.b16 %v223
        %v419 = vunpack.c.h.b16 %v223
        %v420 = vunpack.c.l.b16 %v224
        %v421 = vunpack.c.l.b16 %v225
        %v422 = vunpack.c.h.b16 %v225
        %v423 = vunpack.c.l.b16 %v226
        %v424 = vunpack.c.l.b16 %v227
        %v425 = vunpack.c.h.b16 %v227
        %v426 = vunpack.c.l.b16 %v228
        %v427 = vunpack.c.l.b16 %v229
        %v428 = vunpack.c.h.b16 %v229
        %v429 = vunpack.c.l.b16 %v230
        %v430 = vunpack.c.l.b16 %v231
        %v431 = vunpack.c.h.b16 %v231
        %v432 = vunpack.c.l.b16 %v232
        %v433 = vunpack.c.l.b16 %v233
        %v434 = vunpack.c.h.b16 %v233
        %v435 = vunpack.c.l.b16 %v234
        %v436 = vunpack.c.l.b16 %v235
        %v437 = vunpack.c.h.b16 %v235
        %v438 = vunpack.c.l.b16 %v236
        %v439 = vunpack.c.l.b16 %v237
        %v440 = vunpack.c.h.b16 %v237
        %v441 = vunpack.c.l.b16 %v238
        %v442 = vunpack.c.l.b16 %v239
        %v443 = vunpack.c.h.b16 %v239
        %v444 = vunpack.c.l.b16 %v240
        %v445 = vunpack.c.l.b16 %v241
        %v446 = vunpack.c.h.b16 %v241
        %v447 = vunpack.c.l.b16 %v242
        %v448 = vunpack.c.l.b16 %v243
        %v449 = vunpack.c.h.b16 %v243
        %v450 = vunpack.c.l.b16 %v244
        %v451 = vunpack.c.l.b16 %v245
        %v452 = vunpack.c.h.b16 %v245
        %v453 = vunpack.c.l.b16 %v246
        %v454 = vunpack.c.l.b16 %v247
        %v455 = vunpack.c.h.b16 %v247
        %v456 = vunpack.c.l.b16 %v248
        %v457 = vunpack.c.l.b16 %v249
        %v458 = vunpack.c.h.b16 %v249
        %v459 = vunpack.c.l.b16 %v250
        %v460 = vunpack.c.l.b16 %v251
        %v461 = vunpack.c.h.b16 %v251
        %v462 = vunpack.c.l.b16 %v252
        %v463 = vunpack.c.l.b16 %v253
        %v464 = vunpack.c.h.b16 %v253
        %v465 = vunpack.c.l.b16 %v254
        %v466 = vunpack.c.l.b16 %v255
        %v467 = vunpack.c.h.b16 %v255
        %v468 = vunpack.c.l.b16 %v256
        %v469 = vunpack.c.l.b16 %v257
        %v470 = vunpack.c.h.b16 %v257
        %v471 = vunpack.c.l.b16 %v258
        %v472 = vunpack.c.l.b16 %v259
        %v473 = vunpack.c.h.b16 %v259
        %v474 = vunpack.c.l.b16 %v260
        %v475 = vunpack.c.l.b16 %v261
        %v476 = vunpack.c.h.b16 %v261
        %v477 = vunpack.c.l.b16 %v262
        %v478 = vunpack.c.l.b16 %v263
        %v479 = vunpack.c.h.b16 %v263
        %v480 = vunpack.c.l.b16 %v264
        %v481 = vunpack.c.l.b16 %v265
        %v482 = vunpack.c.h.b16 %v265
        %v483 = vunpack.c.l.b16 %v266
        %v484 = vunpack.c.l.b16 %v267
        %v485 = vunpack.c.h.b16 %v267
        %v486 = vunpack.c.l.b16 %v268
        %v487 = vunpack.c.l.b16 %v269
        %v488 = vunpack.c.h.b16 %v269
        %v489 = vunpack.c.l.b16 %v270
        %v490 = vunpack.c.l.b16 %v271
        %v491 = vunpack.c.h.b16 %v271
        %v492 = vunpack.c.l.b16 %v272
        %v493 = vunpack.c.l.b16 %v273
        %v494 = vunpack.c.h.b16 %v273
        %v495 = vunpack.c.l.b16 %v274
        %v496 = vunpack.c.l.b16 %v275
        %v497 = vunpack.c.h.b16 %v275
        %v498 = vunpack.c.l.b16 %v276
        %v499 = vunpack.c.l.b16 %v277
        %v500 = vunpack.c.h.b16 %v277
        %v501 = vunpack.c.l.b16 %v278
        %v502 = vunpack.c.l.b16 %v279
        %v503 = vunpack.c.h.b16 %v279
        %v504 = vunpack.c.l.b16 %v280
        %v505 = vunpack.c.l.b16 %v281
        %v506 = vunpack.c.h.b16 %v281
        %v507 = vunpack.c.l.b16 %v282
        %v508 = vunpack.c.l.b16 %v283
        %v509 = vunpack.c.h.b16 %v283
        %v510 = vunpack.c.l.b16 %v284
        %v511 = vunpack.c.l.b16 %v285
        %v512 = vunpack.c.h.b16 %v285
        %v513 = vunpack.c.l.b16 %v286
        %v514 = vunpack.c.l.b16 %v287
        %v515 = vunpack.c.h.b16 %v287
        %v516 = vunpack.c.l.b16 %v288
        %v517 = vunpack.c.l.b16 %v289
        %v518 = vunpack.c.h.b16 %v289
        %v519 = vunpack.c.l.b16 %v290
        %v520 = vunpack.c.l.b16 %v291
        %v521 = vunpack.c.h.b16 %v291
        %v522 = vunpack.c.l.b16 %v292
        %v523 = vunpack.c.l.b16 %v293
        %v524 = vunpack.c.h.b16 %v293
        %v525 = vunpack.c.l.b16 %v294
        %v526 = vunpack.c.l.b16 %v295
        %v527 = vunpack.c.h.b16 %v295
        %v528 = vunpack.c.l.b16 %v296
        %v529 = vunpack.c.l.b16 %v297
        %v530 = vunpack.c.h.b16 %v297
        %v531 = vunpack.c.l.b16 %v298
        %v532 = vunpack.c.l.b16 %v299
        %v533 = vunpack.c.h.b16 %v299
        %v534 = vunpack.c.l.b16 %v300
        %v535 = vunpack.c.l.b16 %v301
        %v536 = vunpack.c.h.b16 %v301
        %v537 = vunpack.c.l.b16 %v302
        %v538 = vunpack.c.l.b16 %v303
        %v539 = vunpack.c.h.b16 %v303
        %v540 = vunpack.c.l.b16 %v304
        %v541 = vunpack.c.l.b16 %v305
        %v542 = vunpack.c.h.b16 %v305
        %v543 = vunpack.c.l.b16 %v306
        %v544 = vunpack.c.l.b16 %v307
        %v545 = vunpack.c.h.b16 %v307
        %v546 = vunpack.c.l.b16 %v308
        %v547 = vunpack.c.l.b16 %v309
        %v548 = vunpack.c.h.b16 %v309
        %v549 = vunpack.c.l.b16 %v310
        %v550 = vunpack.c.l.b16 %v311
        %v551 = vunpack.c.h.b16 %v311
        %v552 = vunpack.c.l.b16 %v312
        %v553 = vpack.c.b16 %v412, %v409
        %v554 = vpack.c.b16 %v413, %v410
        %v555 = vpack.c.b16 %v414, %v411
        %v556 = vpack.c.b16 %v418, %v415
        %v557 = vpack.c.b16 %v419, %v416
        %v558 = vpack.c.b16 %v420, %v417
        %v559 = vpack.c.b16 %v424, %v421
        %v560 = vpack.c.b16 %v425, %v422
        %v561 = vpack.c.b16 %v426, %v423
        %v562 = vpack.c.b16 %v430, %v427
        %v563 = vpack.c.b16 %v431, %v428
        %v564 = vpack.c.b16 %v432, %v429
        %v565 = vpack.c.b16 %v436, %v433
        %v566 = vpack.c.b16 %v437, %v434
        %v567 = vpack.c.b16 %v438, %v435
        %v568 = vpack.c.b16 %v442, %v439
        %v569 = vpack.c.b16 %v443, %v440
        %v570 = vpack.c.b16 %v444, %v441
        %v571 = vpack.c.b16 %v448, %v445
        %v572 = vpack.c.b16 %v449, %v446
        %v573 = vpack.c.b16 %v450, %v447
        %v574 = vpack.c.b16 %v454, %v451
        %v575 = vpack.c.b16 %v455, %v452
        %v576 = vpack.c.b16 %v456, %v453
        %v577 = vpack.c.b16 %v460, %v457
        %v578 = vpack.c.b16 %v461, %v458
        %v579 = vpack.c.b16 %v462, %v459
        %v580 = vpack.c.b16 %v466, %v463
        %v581 = vpack.c.b16 %v467, %v464
        %v582 = vpack.c.b16 %v468, %v465
        %v583 = vpack.c.b16 %v472, %v469
        %v584 = vpack.c.b16 %v473, %v470
        %v585 = vpack.c.b16 %v474, %v471
        %v586 = vpack.c.b16 %v478, %v475
        %v587 = vpack.c.b16 %v479, %v476
        %v588 = vpack.c.b16 %v480, %v477
        %v589 = vpack.c.b16 %v484, %v481
        %v590 = vpack.c.b16 %v485, %v482
        %v591 = vpack.c.b16 %v486, %v483
        %v592 = vpack.c.b16 %v490, %v487
        %v593 = vpack.c.b16 %v491, %v488
        %v594 = vpack.c.b16 %v492, %v489
        %v595 = vpack.c.b16 %v496, %v493
        %v596 = vpack.c.b16 %v497, %v494
        %v597 = vpack.c.b16 %v498, %v495
        %v598 = vpack.c.b16 %v502, %v499
        %v599 = vpack.c.b16 %v503, %v500
        %v600 = vpack.c.b16 %v504, %v501
        %v601 = vpack.c.b16 %v508, %v505
        %v602 = vpack.c.b16 %v509, %v506
        %v603 = vpack.c.b16 %v510, %v507
        %v604 = vpack.c.b16 %v514, %v511
        %v605 = vpack.c.b16 %v515, %v512
        %v606 = vpack.c.b16 %v516, %v513
        %v607 = vpack.c.b16 %v520, %v517
        %v608 = vpack.c.b16 %v521, %v518
        %v609 = vpack.c.b16 %v522, %v519
        %v610 = vpack.c.b16 %v526, %v523
        %v611 = vpack.c.b16 %v527, %v524
        %v612 = vpack.c.b16 %v528, %v525
        %v613 = vpack.c.b16 %v532, %v529
        %v614 = vpack.c.b16 %v533, %v530
        %v615 = vpack.c.b16 %v534, %v531
        %v616 = vpack.c.b16 %v538, %v535
        %v617 = vpack.c.b16 %v539, %v536
        %v618 = vpack.c.b16 %v540, %v537
        %v619 = vpack.c.b16 %v544, %v541
        %v620 = vpack.c.b16 %v545, %v542
        %v621 = vpack.c.b16 %v546, %v543
        %v622 = vpack.c.b16 %v550, %v547
        %v623 = vpack.c.b16 %v551, %v548
        %v624 = vpack.c.b16 %v552, %v549
        %697 = vmatprep.subr.bf16.mxu0 %v554
        %698 = vmatpush1.bf16.msra.mxu0 %v553
        %699 = vmatprep.subr.bf16.mxu0 %v557
        %700 = vmatpush1.bf16.msra.mxu0 %v556
        %701 = vmatprep.subr.bf16.mxu0 %v560
        %702 = vmatpush1.bf16.msra.mxu0 %v559
        %703 = vmatprep.subr.bf16.mxu0 %v563
        %704 = vmatpush1.bf16.msra.mxu0 %v562
        %705 = vmatprep.subr.bf16.mxu0 %v566
        %706 = vmatpush1.bf16.msra.mxu0 %v565
        %707 = vmatprep.subr.bf16.mxu0 %v569
        %708 = vmatpush1.bf16.msra.mxu0 %v568
        %709 = vmatprep.subr.bf16.mxu0 %v572
        %710 = vmatpush1.bf16.msra.mxu0 %v571
        %711 = vmatprep.subr.bf16.mxu0 %v575
        %712 = vmatpush1.bf16.msra.mxu0 %v574
        %713 = vmatprep.subr.bf16.mxu0 %v578
        %714 = vmatpush1.bf16.msra.mxu0 %v577
        %715 = vmatprep.subr.bf16.mxu0 %v581
        %716 = vmatpush1.bf16.msra.mxu0 %v580
        %717 = vmatprep.subr.bf16.mxu0 %v584
        %718 = vmatpush1.bf16.msra.mxu0 %v583
        %719 = vmatprep.subr.bf16.mxu0 %v587
        %720 = vmatpush1.bf16.msra.mxu0 %v586
        %721 = vmatprep.subr.bf16.mxu0 %v590
        %722 = vmatpush1.bf16.msra.mxu0 %v589
        %723 = vmatprep.subr.bf16.mxu0 %v593
        %724 = vmatpush1.bf16.msra.mxu0 %v592
        %725 = vmatprep.subr.bf16.mxu0 %v596
        %726 = vmatpush1.bf16.msra.mxu0 %v595
        %727 = vmatprep.subr.bf16.mxu0 %v599
        %728 = vmatpush1.bf16.msra.mxu0 %v598
        %729 = vmatprep.mubr.bf16.mxu0 %v206
        %730 = vmatmul.mubr.bf16.gmra.mrb[0].mxu0 %v205
        %v731 = vpop.f32.mrb[0].mxu0
        %v732 = vadd.f32 0.0, %v731
        %v733 = vpop.f32.mrb[0].mxu0
        %v734 = vadd.f32 0.0, %v733
        %v735 = vpop.f32.mrb[0].mxu0
        %v736 = vadd.f32 0.0, %v735
        %v737 = vpop.f32.mrb[0].mxu0
        %v738 = vadd.f32 0.0, %v737
        %739 = vmatprep.mubr.bf16.mxu0 %v209
        %740 = vmatmul.mubr.bf16.gmra.mrb[0].mxu0 %v208
        %v741 = vpop.f32.mrb[0].mxu0
        %v742 = vadd.f32 0.0, %v741
        %v743 = vpop.f32.mrb[0].mxu0
        %v744 = vadd.f32 0.0, %v743
        %v745 = vpop.f32.mrb[0].mxu0
        %v746 = vadd.f32 0.0, %v745
        %v747 = vpop.f32.mrb[0].mxu0
        %v748 = vadd.f32 0.0, %v747
        %749 = vmatprep.mubr.bf16.mxu0 %v212
        %750 = vmatmul.mubr.bf16.gmra.mrb[0].mxu0 %v211
        %v751 = vpop.f32.mrb[0].mxu0
        %v752 = vadd.f32 0.0, %v751
        %v753 = vpop.f32.mrb[0].mxu0
        %v754 = vadd.f32 0.0, %v753
        %v755 = vpop.f32.mrb[0].mxu0
        %v756 = vadd.f32 0.0, %v755
        %v757 = vpop.f32.mrb[0].mxu0
        %v758 = vadd.f32 0.0, %v757
        %759 = vmatprep.mubr.bf16.mxu0 %v215
        %760 = vmatmul.mubr.bf16.gmra.mrb[0].mxu0 %v214
        %v761 = vpop.f32.mrb[0].mxu0
        %v762 = vadd.f32 0.0, %v761
        %v763 = vpop.f32.mrb[0].mxu0
        %v764 = vadd.f32 0.0, %v763
        %v765 = vpop.f32.mrb[0].mxu0
        %v766 = vadd.f32 0.0, %v765
        %v767 = vpop.f32.mrb[0].mxu0
        %v768 = vadd.f32 0.0, %v767
        %769 = vdwg.mxu0
        %770 = vmatprep.subr.bf16.mxu0 %v602
        %771 = vmatpush1.bf16.msra.mxu0 %v601
        %772 = vmatprep.subr.bf16.mxu0 %v605
        %773 = vmatpush1.bf16.msra.mxu0 %v604
        %774 = vmatprep.subr.bf16.mxu0 %v608
        %775 = vmatpush1.bf16.msra.mxu0 %v607
        %776 = vmatprep.subr.bf16.mxu0 %v611
        %777 = vmatpush1.bf16.msra.mxu0 %v610
        %778 = vmatprep.subr.bf16.mxu0 %v614
        %779 = vmatpush1.bf16.msra.mxu0 %v613
        %780 = vmatprep.subr.bf16.mxu0 %v617
        %781 = vmatpush1.bf16.msra.mxu0 %v616
        %782 = vmatprep.subr.bf16.mxu0 %v620
        %783 = vmatpush1.bf16.msra.mxu0 %v619
        %784 = vmatprep.subr.bf16.mxu0 %v623
        %785 = vmatpush1.bf16.msra.mxu0 %v622
        %786 = vmatprep.subr.bf16.mxu0 0
        %787 = vmatpush1.bf16.msra.mxu0 0
        %788 = vmatprep.subr.bf16.mxu0 0
        %789 = vmatpush1.bf16.msra.mxu0 0
        %790 = vmatprep.subr.bf16.mxu0 0
        %791 = vmatpush1.bf16.msra.mxu0 0
        %792 = vmatprep.subr.bf16.mxu0 0
        %793 = vmatpush1.bf16.msra.mxu0 0
        %794 = vmatprep.subr.bf16.mxu0 0
        %795 = vmatpush1.bf16.msra.mxu0 0
        %796 = vmatprep.subr.bf16.mxu0 0
        %797 = vmatpush1.bf16.msra.mxu0 0
        %798 = vmatprep.subr.bf16.mxu0 0
        %799 = vmatpush1.bf16.msra.mxu0 0
        %800 = vmatprep.subr.bf16.mxu0 0
        %801 = vmatpush1.bf16.msra.mxu0 0
        %802 = vmatprep.mubr.bf16.mxu0 0
        %803 = vmatmul.mubr.bf16.gmra.mrb[0].mxu0 %v207
        %v804 = vpop.f32.mrb[0].mxu0
        %v805 = vadd.f32 %v732, %v804
        %v806 = vpop.f32.mrb[0].mxu0
        %v807 = vadd.f32 %v734, %v806
        %v808 = vpop.f32.mrb[0].mxu0
        %v809 = vadd.f32 %v736, %v808
        %v810 = vpop.f32.mrb[0].mxu0
        %v811 = vadd.f32 %v738, %v810
        %812 = vmatprep.mubr.bf16.mxu0 0
        %813 = vmatmul.mubr.bf16.gmra.mrb[0].mxu0 %v210
        %v814 = vpop.f32.mrb[0].mxu0
        %v815 = vadd.f32 %v742, %v814
        %v816 = vpop.f32.mrb[0].mxu0
        %v817 = vadd.f32 %v744, %v816
        %v818 = vpop.f32.mrb[0].mxu0
        %v819 = vadd.f32 %v746, %v818
        %v820 = vpop.f32.mrb[0].mxu0
        %v821 = vadd.f32 %v748, %v820
        %822 = vmatprep.mubr.bf16.mxu0 0
        %823 = vmatmul.mubr.bf16.gmra.mrb[0].mxu0 %v213
        %v824 = vpop.f32.mrb[0].mxu0
        %v825 = vadd.f32 %v752, %v824
        %v826 = vpop.f32.mrb[0].mxu0
        %v827 = vadd.f32 %v754, %v826
        %v828 = vpop.f32.mrb[0].mxu0
        %v829 = vadd.f32 %v756, %v828
        %v830 = vpop.f32.mrb[0].mxu0
        %v831 = vadd.f32 %v758, %v830
        %832 = vmatprep.mubr.bf16.mxu0 0
        %833 = vmatmul.mubr.bf16.gmra.mrb[0].mxu0 %v216
        %v834 = vpop.f32.mrb[0].mxu0
        %v835 = vadd.f32 %v762, %v834
        %v836 = vpop.f32.mrb[0].mxu0
        %v837 = vadd.f32 %v764, %v836
        %v838 = vpop.f32.mrb[0].mxu0
        %v839 = vadd.f32 %v766, %v838
        %v840 = vpop.f32.mrb[0].mxu0
        %v841 = vadd.f32 %v768, %v840
        %842 = vdwg.mxu0
        %843 = vmatprep.subr.bf16.mxu0 0
        %844 = vmatpush1.bf16.msra.mxu0 %v555
        %845 = vmatprep.subr.bf16.mxu0 0
        %846 = vmatpush1.bf16.msra.mxu0 %v558
        %847 = vmatprep.subr.bf16.mxu0 0
        %848 = vmatpush1.bf16.msra.mxu0 %v561
        %849 = vmatprep.subr.bf16.mxu0 0
        %850 = vmatpush1.bf16.msra.mxu0 %v564
        %851 = vmatprep.subr.bf16.mxu0 0
        %852 = vmatpush1.bf16.msra.mxu0 %v567
        %853 = vmatprep.subr.bf16.mxu0 0
        %854 = vmatpush1.bf16.msra.mxu0 %v570
        %855 = vmatprep.subr.bf16.mxu0 0
        %856 = vmatpush1.bf16.msra.mxu0 %v573
        %857 = vmatprep.subr.bf16.mxu0 0
        %858 = vmatpush1.bf16.msra.mxu0 %v576
        %859 = vmatprep.subr.bf16.mxu0 0
        %860 = vmatpush1.bf16.msra.mxu0 %v579
        %861 = vmatprep.subr.bf16.mxu0 0
        %862 = vmatpush1.bf16.msra.mxu0 %v582
        %863 = vmatprep.subr.bf16.mxu0 0
        %864 = vmatpush1.bf16.msra.mxu0 %v585
        %865 = vmatprep.subr.bf16.mxu0 0
        %866 = vmatpush1.bf16.msra.mxu0 %v588
        %867 = vmatprep.subr.bf16.mxu0 0
        %868 = vmatpush1.bf16.msra.mxu0 %v591
        %869 = vmatprep.subr.bf16.mxu0 0
        %870 = vmatpush1.bf16.msra.mxu0 %v594
        %871 = vmatprep.subr.bf16.mxu0 0
        %872 = vmatpush1.bf16.msra.mxu0 %v597
        %873 = vmatprep.subr.bf16.mxu0 0
        %874 = vmatpush1.bf16.msra.mxu0 %v600
        %875 = vmatprep.mubr.bf16.mxu0 %v206
        %876 = vmatmul.mubr.bf16.gmra.mrb[0].mxu0 %v205
        %v877 = vpop.f32.mrb[0].mxu0
        %v878 = vadd.f32 0.0, %v877
        %v879 = vpop.f32.mrb[0].mxu0
        %v880 = vpop.f32.mrb[0].mxu0
        %v881 = vadd.f32 0.0, %v880
        %v882 = vpop.f32.mrb[0].mxu0
        %883 = vmatprep.mubr.bf16.mxu0 %v209
        %884 = vmatmul.mubr.bf16.gmra.mrb[0].mxu0 %v208
        %v885 = vpop.f32.mrb[0].mxu0
        %v886 = vadd.f32 0.0, %v885
        %v887 = vpop.f32.mrb[0].mxu0
        %v888 = vpop.f32.mrb[0].mxu0
        %v889 = vadd.f32 0.0, %v888
        %v890 = vpop.f32.mrb[0].mxu0
        %891 = vmatprep.mubr.bf16.mxu0 %v212
        %892 = vmatmul.mubr.bf16.gmra.mrb[0].mxu0 %v211
        %v893 = vpop.f32.mrb[0].mxu0
        %v894 = vadd.f32 0.0, %v893
        %v895 = vpop.f32.mrb[0].mxu0
        %v896 = vpop.f32.mrb[0].mxu0
        %v897 = vadd.f32 0.0, %v896
        %v898 = vpop.f32.mrb[0].mxu0
        %899 = vmatprep.mubr.bf16.mxu0 %v215
        %900 = vmatmul.mubr.bf16.gmra.mrb[0].mxu0 %v214
        %v901 = vpop.f32.mrb[0].mxu0
        %v902 = vadd.f32 0.0, %v901
        %v903 = vpop.f32.mrb[0].mxu0
        %v904 = vpop.f32.mrb[0].mxu0
        %v905 = vadd.f32 0.0, %v904
        %v906 = vpop.f32.mrb[0].mxu0
        %907 = vdwg.mxu0
        %908 = vmatprep.subr.bf16.mxu0 0
        %909 = vmatpush1.bf16.msra.mxu0 %v603
        %910 = vmatprep.subr.bf16.mxu0 0
        %911 = vmatpush1.bf16.msra.mxu0 %v606
        %912 = vmatprep.subr.bf16.mxu0 0
        %913 = vmatpush1.bf16.msra.mxu0 %v609
        %914 = vmatprep.subr.bf16.mxu0 0
        %915 = vmatpush1.bf16.msra.mxu0 %v612
        %916 = vmatprep.subr.bf16.mxu0 0
        %917 = vmatpush1.bf16.msra.mxu0 %v615
        %918 = vmatprep.subr.bf16.mxu0 0
        %919 = vmatpush1.bf16.msra.mxu0 %v618
        %920 = vmatprep.subr.bf16.mxu0 0
        %921 = vmatpush1.bf16.msra.mxu0 %v621
        %922 = vmatprep.subr.bf16.mxu0 0
        %923 = vmatpush1.bf16.msra.mxu0 %v624
        %924 = vmatprep.subr.bf16.mxu0 0
        %925 = vmatpush1.bf16.msra.mxu0 0
        %926 = vmatprep.subr.bf16.mxu0 0
        %927 = vmatpush1.bf16.msra.mxu0 0
        %928 = vmatprep.subr.bf16.mxu0 0
        %929 = vmatpush1.bf16.msra.mxu0 0
        %930 = vmatprep.subr.bf16.mxu0 0
        %931 = vmatpush1.bf16.msra.mxu0 0
        %932 = vmatprep.subr.bf16.mxu0 0
        %933 = vmatpush1.bf16.msra.mxu0 0
        %934 = vmatprep.subr.bf16.mxu0 0
        %935 = vmatpush1.bf16.msra.mxu0 0
        %936 = vmatprep.subr.bf16.mxu0 0
        %937 = vmatpush1.bf16.msra.mxu0 0
        %938 = vmatprep.subr.bf16.mxu0 0
        %939 = vmatpush1.bf16.msra.mxu0 0
        %940 = vmatprep.mubr.bf16.mxu0 0
        %941 = vmatmul.mubr.bf16.gmra.mrb[0].mxu0 %v207
        %v942 = vpop.f32.mrb[0].mxu0
        %v943 = vadd.f32 %v878, %v942
        %v944 = vpop.f32.mrb[0].mxu0
        %v945 = vpop.f32.mrb[0].mxu0
        %v946 = vadd.f32 %v881, %v945
        %v947 = vpop.f32.mrb[0].mxu0
        %948 = vmatprep.mubr.bf16.mxu0 0
        %949 = vmatmul.mubr.bf16.gmra.mrb[0].mxu0 %v210
        %v950 = vpop.f32.mrb[0].mxu0
        %v951 = vadd.f32 %v886, %v950
        %v952 = vpop.f32.mrb[0].mxu0
        %v953 = vpop.f32.mrb[0].mxu0
        %v954 = vadd.f32 %v889, %v953
        %v955 = vpop.f32.mrb[0].mxu0
        %956 = vmatprep.mubr.bf16.mxu0 0
        %957 = vmatmul.mubr.bf16.gmra.mrb[0].mxu0 %v213
        %v958 = vpop.f32.mrb[0].mxu0
        %v959 = vadd.f32 %v894, %v958
        %v960 = vpop.f32.mrb[0].mxu0
        %v961 = vpop.f32.mrb[0].mxu0
        %v962 = vadd.f32 %v897, %v961
        %v963 = vpop.f32.mrb[0].mxu0
        %964 = vmatprep.mubr.bf16.mxu0 0
        %965 = vmatmul.mubr.bf16.gmra.mrb[0].mxu0 %v216
        %v966 = vpop.f32.mrb[0].mxu0
        %v967 = vadd.f32 %v902, %v966
        %v968 = vpop.f32.mrb[0].mxu0
        %v969 = vpop.f32.mrb[0].mxu0
        %v970 = vadd.f32 %v905, %v969
        %v971 = vpop.f32.mrb[0].mxu0
        %972 = vdwg.mxu0
        %v973 = vpack.c.bf16 %v809, %v805
        %v974 = vpack.c.bf16 %v819, %v815
        %v975 = vpack.c.bf16 %v829, %v825
        %v976 = vpack.c.bf16 %v839, %v835
        %v977 = vpack.c.bf16 %v811, %v807
        %v978 = vpack.c.bf16 %v821, %v817
        %v979 = vpack.c.bf16 %v831, %v827
        %v980 = vpack.c.bf16 %v841, %v837
        %v981 = vpack.c.bf16 %v946, %v943
        %v982 = vpack.c.bf16 %v954, %v951
        %v983 = vpack.c.bf16 %v962, %v959
        %v984 = vpack.c.bf16 %v970, %v967
        %985 = vmatprep.subr.bf16.mxu0 0
        %986 = vmatpush1.bf16.xpose.msra.mxu0 %v977
        %987 = vmatprep.subr.bf16.mxu0 0
        %988 = vmatpush1.bf16.xpose.msra.mxu0 %v978
        %989 = vmatprep.subr.bf16.mxu0 0
        %990 = vmatpush1.bf16.xpose.msra.mxu0 0
        %991 = vmatprep.subr.bf16.mxu0 0
        %992 = vmatpush1.bf16.xpose.msra.mxu0 0
        %993 = vmatprep.subr.bf16.mxu0 0
        %994 = vmatpush1.bf16.xpose.msra.mxu0 0
        %995 = vmatprep.subr.bf16.mxu0 0
        %996 = vmatpush1.bf16.xpose.msra.mxu0 0
        %997 = vmatprep.subr.bf16.mxu0 0
        %998 = vmatpush1.bf16.xpose.msra.mxu0 0
        %999 = vmatprep.subr.bf16.mxu0 0
        %1000 = vmatpush1.bf16.xpose.msra.mxu0 0
        %1001 = vmatprep.subr.bf16.mxu0 0
        %1002 = vmatpush1.bf16.xpose.msra.mxu0 0
        %1003 = vmatprep.subr.bf16.mxu0 0
        %1004 = vmatpush1.bf16.xpose.msra.mxu0 0
        %1005 = vmatprep.subr.bf16.mxu0 0
        %1006 = vmatpush1.bf16.xpose.msra.mxu0 0
        %1007 = vmatprep.subr.bf16.mxu0 0
        %1008 = vmatpush1.bf16.xpose.msra.mxu0 0
        %1009 = vmatprep.subr.bf16.mxu0 0
        %1010 = vmatpush1.bf16.xpose.msra.mxu0 0
        %1011 = vmatprep.subr.bf16.mxu0 0
        %1012 = vmatpush1.bf16.xpose.msra.mxu0 0
        %1013 = vmatprep.subr.bf16.mxu0 0
        %1014 = vmatpush1.bf16.xpose.msra.mxu0 0
        %1015 = vmatprep.subr.bf16.mxu0 0
        %1016 = vmatpush1.bf16.xpose.msra.mxu0 0
        %1017 = vmatprep.mubr.bf16.mxu0 0
        %1018 = vmatmul.mubr.bf16.gmra.mrb[0].mxu0 %v973
        %v1019 = vpop.f32.mrb[0].mxu0
        %v1020 = vadd.f32 0.0, %v1019
        %v1021 = vpop.f32.mrb[0].mxu0
        %v1022 = vpop.f32.mrb[0].mxu0
        %v1023 = vadd.f32 0.0, %v1022
        %v1024 = vpop.f32.mrb[0].mxu0
        %1025 = vmatprep.mubr.bf16.mxu0 0
        %1026 = vmatmul.mubr.bf16.gmra.mrb[0].mxu0 %v974
        %v1027 = vpop.f32.mrb[0].mxu0
        %v1028 = vadd.f32 0.0, %v1027
        %v1029 = vpop.f32.mrb[0].mxu0
        %v1030 = vpop.f32.mrb[0].mxu0
        %v1031 = vadd.f32 0.0, %v1030
        %v1032 = vpop.f32.mrb[0].mxu0
        %1033 = vdwg.mxu0
        %1034 = vmatprep.subr.bf16.mxu0 0
        %1035 = vmatpush1.bf16.xpose.msra.mxu0 %v979
        %1036 = vmatprep.subr.bf16.mxu0 0
        %1037 = vmatpush1.bf16.xpose.msra.mxu0 %v980
        %1038 = vmatprep.subr.bf16.mxu0 0
        %1039 = vmatpush1.bf16.xpose.msra.mxu0 0
        %1040 = vmatprep.subr.bf16.mxu0 0
        %1041 = vmatpush1.bf16.xpose.msra.mxu0 0
        %1042 = vmatprep.subr.bf16.mxu0 0
        %1043 = vmatpush1.bf16.xpose.msra.mxu0 0
        %1044 = vmatprep.subr.bf16.mxu0 0
        %1045 = vmatpush1.bf16.xpose.msra.mxu0 0
        %1046 = vmatprep.subr.bf16.mxu0 0
        %1047 = vmatpush1.bf16.xpose.msra.mxu0 0
        %1048 = vmatprep.subr.bf16.mxu0 0
        %1049 = vmatpush1.bf16.xpose.msra.mxu0 0
        %1050 = vmatprep.subr.bf16.mxu0 0
        %1051 = vmatpush1.bf16.xpose.msra.mxu0 0
        %1052 = vmatprep.subr.bf16.mxu0 0
        %1053 = vmatpush1.bf16.xpose.msra.mxu0 0
        %1054 = vmatprep.subr.bf16.mxu0 0
        %1055 = vmatpush1.bf16.xpose.msra.mxu0 0
        %1056 = vmatprep.subr.bf16.mxu0 0
        %1057 = vmatpush1.bf16.xpose.msra.mxu0 0
        %1058 = vmatprep.subr.bf16.mxu0 0
        %1059 = vmatpush1.bf16.xpose.msra.mxu0 0
        %1060 = vmatprep.subr.bf16.mxu0 0
        %1061 = vmatpush1.bf16.xpose.msra.mxu0 0
        %1062 = vmatprep.subr.bf16.mxu0 0
        %1063 = vmatpush1.bf16.xpose.msra.mxu0 0
        %1064 = vmatprep.subr.bf16.mxu0 0
        %1065 = vmatpush1.bf16.xpose.msra.mxu0 0
        %1066 = vmatprep.mubr.bf16.mxu0 0
        %1067 = vmatmul.mubr.bf16.gmra.mrb[0].mxu0 %v975
        %v1068 = vpop.f32.mrb[0].mxu0
        %v1069 = vadd.f32 0.0, %v1068
        %v1070 = vpop.f32.mrb[0].mxu0
        %v1071 = vpop.f32.mrb[0].mxu0
        %v1072 = vadd.f32 0.0, %v1071
        %v1073 = vpop.f32.mrb[0].mxu0
        %1074 = vmatprep.mubr.bf16.mxu0 0
        %1075 = vmatmul.mubr.bf16.gmra.mrb[0].mxu0 %v976
        %v1076 = vpop.f32.mrb[0].mxu0
        %v1077 = vadd.f32 0.0, %v1076
        %v1078 = vpop.f32.mrb[0].mxu0
        %v1079 = vpop.f32.mrb[0].mxu0
        %v1080 = vadd.f32 0.0, %v1079
        %v1081 = vpop.f32.mrb[0].mxu0
        %1082 = vdwg.mxu0
        %v1083 = vlaneseq
        %v1084 = vshrl.u32 %v1083, 7
        %v1085 = vadd.s32 %v1084, 8
        %v1086 = vadd.s32 %v1084, 16
        %v1087 = vadd.s32 %v1084, 24
        %v1088 = vlaneseq
        %v1089 = vand.u32 %v1088, 127
        %vm1090 = vcmp.le.s32.totalorder %v1089, %v1084
        %vm1091 = vcmp.le.s32.totalorder %v1089, %v1085
        %vm1092 = vcmp.le.s32.totalorder %v1089, %v1086
        %vm1093 = vcmp.le.s32.totalorder %v1089, %v1087
        %v1094 = vsel %vm1090, 1, 0
        %v1095 = vsel %vm1091, 1, 0
        %v1096 = vsel %vm1092, 1, 0
        %v1097 = vsel %vm1093, 1, 0
        %vm1098 = vcmp.eq.s32.totalorder %v1094, 1
        %vm1099 = vcmp.eq.s32.totalorder %v1095, 1
        %vm1100 = vcmp.eq.s32.totalorder %v1096, 1
        %vm1101 = vcmp.eq.s32.totalorder %v1097, 1
        %v1102 = vsel %vm1098, %v1020, -inf
        %v1103 = vsel %vm1099, %v1023, -inf
        %v1104 = vsel %vm1100, %v1028, -inf
        %v1105 = vsel %vm1101, %v1031, -inf
        %v1106 = vsel %vm1098, %v1069, -inf
        %v1107 = vsel %vm1099, %v1072, -inf
        %v1108 = vsel %vm1100, %v1077, -inf
        %v1109 = vsel %vm1101, %v1080, -inf
        %vm1110 = vcmask 261120
        %v1111 = vsel %vm1110, %v1102, -inf
        %1112 = vmax.xlane.f32.xlu0 %v1111
        %v1113 = vpop.xlane.xlu0 %1112
        %v1114 = vsel %vm1110, %v1103, -inf
        %1115 = vmax.xlane.f32.xlu0 %v1114
        %v1116 = vpop.xlane.xlu0 %1115
        %v1117 = vsel %vm1110, %v1104, -inf
        %1118 = vmax.xlane.f32.xlu0 %v1117
        %v1119 = vpop.xlane.xlu0 %1118
        %v1120 = vsel %vm1110, %v1105, -inf
        %1121 = vmax.xlane.f32.xlu0 %v1120
        %v1122 = vpop.xlane.xlu0 %1121
        %v1123 = vsel %vm1110, %v1106, -inf
        %1124 = vmax.xlane.f32.xlu0 %v1123
        %v1125 = vpop.xlane.xlu0 %1124
        %v1126 = vsel %vm1110, %v1107, -inf
        %1127 = vmax.xlane.f32.xlu0 %v1126
        %v1128 = vpop.xlane.xlu0 %1127
        %v1129 = vsel %vm1110, %v1108, -inf
        %1130 = vmax.xlane.f32.xlu0 %v1129
        %v1131 = vpop.xlane.xlu0 %1130
        %v1132 = vsel %vm1110, %v1109, -inf
        %1133 = vmax.xlane.f32.xlu0 %v1132
        %v1134 = vpop.xlane.xlu0 %1133
        %v1135 = vsub.f32 %v1102, %v1113
        %v1136 = vsub.f32 %v1103, %v1116
        %v1137 = vsub.f32 %v1104, %v1119
        %v1138 = vsub.f32 %v1105, %v1122
        %v1139 = vsub.f32 %v1106, %v1125
        %v1140 = vsub.f32 %v1107, %v1128
        %v1141 = vsub.f32 %v1108, %v1131
        %v1142 = vsub.f32 %v1109, %v1134
        %v1143 = vmul.f32 %v1135, 1.442695
        %v1144 = vpow.pop %v1143
        %v1145 = vmul.f32 %v1136, 1.442695
        %v1146 = vpow.pop %v1145
        %v1147 = vmul.f32 %v1137, 1.442695
        %v1148 = vpow.pop %v1147
        %v1149 = vmul.f32 %v1138, 1.442695
        %v1150 = vpow.pop %v1149
        %v1151 = vmul.f32 %v1139, 1.442695
        %v1152 = vpow.pop %v1151
        %v1153 = vmul.f32 %v1140, 1.442695
        %v1154 = vpow.pop %v1153
        %v1155 = vmul.f32 %v1141, 1.442695
        %v1156 = vpow.pop %v1155
        %v1157 = vmul.f32 %v1142, 1.442695
        %v1158 = vpow.pop %v1157
        %v1159 = vsel %vm1110, %v1144, 0.0
        %1160 = vadd.xlane.f32.xlu0 %v1159
        %v1161 = vpop.xlane.xlu0 %1160
        %v1162 = vsel %vm1110, %v1146, 0.0
        %1163 = vadd.xlane.f32.xlu0 %v1162
        %v1164 = vpop.xlane.xlu0 %1163
        %v1165 = vsel %vm1110, %v1148, 0.0
        %1166 = vadd.xlane.f32.xlu0 %v1165
        %v1167 = vpop.xlane.xlu0 %1166
        %v1168 = vsel %vm1110, %v1150, 0.0
        %1169 = vadd.xlane.f32.xlu0 %v1168
        %v1170 = vpop.xlane.xlu0 %1169
        %v1171 = vsel %vm1110, %v1152, 0.0
        %1172 = vadd.xlane.f32.xlu0 %v1171
        %v1173 = vpop.xlane.xlu0 %1172
        %v1174 = vsel %vm1110, %v1154, 0.0
        %1175 = vadd.xlane.f32.xlu0 %v1174
        %v1176 = vpop.xlane.xlu0 %1175
        %v1177 = vsel %vm1110, %v1156, 0.0
        %1178 = vadd.xlane.f32.xlu0 %v1177
        %v1179 = vpop.xlane.xlu0 %1178
        %v1180 = vsel %vm1110, %v1158, 0.0
        %1181 = vadd.xlane.f32.xlu0 %v1180
        %v1182 = vpop.xlane.xlu0 %1181
        %v1183 = vpack.c.bf16 %v1146, %v1144
        %v1184 = vpack.c.bf16 %v1150, %v1148
        %v1185 = vpack.c.bf16 %v1154, %v1152
        %v1186 = vpack.c.bf16 %v1158, %v1156
        %v1188 = vsel %vm1110, %v1183, 0
        %v1191 = vsel %vm1110, %v1184, 0
        %1193 = vmatprep.subr.bf16.mxu0 0
        %1194 = vmatpush1.bf16.msra.mxu0 %v981
        %1195 = vmatprep.subr.bf16.mxu0 0
        %1196 = vmatpush1.bf16.msra.mxu0 %v982
        %1197 = vmatprep.subr.bf16.mxu0 0
        %1198 = vmatpush1.bf16.msra.mxu0 0
        %1199 = vmatprep.subr.bf16.mxu0 0
        %1200 = vmatpush1.bf16.msra.mxu0 0
        %1201 = vmatprep.subr.bf16.mxu0 0
        %1202 = vmatpush1.bf16.msra.mxu0 0
        %1203 = vmatprep.subr.bf16.mxu0 0
        %1204 = vmatpush1.bf16.msra.mxu0 0
        %1205 = vmatprep.subr.bf16.mxu0 0
        %1206 = vmatpush1.bf16.msra.mxu0 0
        %1207 = vmatprep.subr.bf16.mxu0 0
        %1208 = vmatpush1.bf16.msra.mxu0 0
        %1209 = vmatprep.subr.bf16.mxu0 0
        %1210 = vmatpush1.bf16.msra.mxu0 0
        %1211 = vmatprep.subr.bf16.mxu0 0
        %1212 = vmatpush1.bf16.msra.mxu0 0
        %1213 = vmatprep.subr.bf16.mxu0 0
        %1214 = vmatpush1.bf16.msra.mxu0 0
        %1215 = vmatprep.subr.bf16.mxu0 0
        %1216 = vmatpush1.bf16.msra.mxu0 0
        %1217 = vmatprep.subr.bf16.mxu0 0
        %1218 = vmatpush1.bf16.msra.mxu0 0
        %1219 = vmatprep.subr.bf16.mxu0 0
        %1220 = vmatpush1.bf16.msra.mxu0 0
        %1221 = vmatprep.subr.bf16.mxu0 0
        %1222 = vmatpush1.bf16.msra.mxu0 0
        %1223 = vmatprep.subr.bf16.mxu0 0
        %1224 = vmatpush1.bf16.msra.mxu0 0
        %1225 = vmatprep.mubr.bf16.mxu0 0
        %1226 = vmatmul.mubr.bf16.gmra.mrb[0].mxu0 %v1188
        %v1227 = vpop.f32.mrb[0].mxu0
        %v1228 = vadd.f32 0.0, %v1227
        %v1229 = vpop.f32.mrb[0].mxu0
        %v1230 = vpop.f32.mrb[0].mxu0
        %v1231 = vadd.f32 0.0, %v1230
        %v1232 = vpop.f32.mrb[0].mxu0
        %1233 = vmatprep.mubr.bf16.mxu0 0
        %1234 = vmatmul.mubr.bf16.gmra.mrb[0].mxu0 %v1191
        %v1235 = vpop.f32.mrb[0].mxu0
        %v1236 = vadd.f32 0.0, %v1235
        %v1237 = vpop.f32.mrb[0].mxu0
        %v1238 = vpop.f32.mrb[0].mxu0
        %v1239 = vadd.f32 0.0, %v1238
        %v1240 = vpop.f32.mrb[0].mxu0
        %1241 = vdwg.mxu0
        %v1243 = vsel %vm1110, %v1185, 0
        %v1246 = vsel %vm1110, %v1186, 0
        %1248 = vmatprep.subr.bf16.mxu0 0
        %1249 = vmatpush1.bf16.msra.mxu0 %v983
        %1250 = vmatprep.subr.bf16.mxu0 0
        %1251 = vmatpush1.bf16.msra.mxu0 %v984
        %1252 = vmatprep.subr.bf16.mxu0 0
        %1253 = vmatpush1.bf16.msra.mxu0 0
        %1254 = vmatprep.subr.bf16.mxu0 0
        %1255 = vmatpush1.bf16.msra.mxu0 0
        %1256 = vmatprep.subr.bf16.mxu0 0
        %1257 = vmatpush1.bf16.msra.mxu0 0
        %1258 = vmatprep.subr.bf16.mxu0 0
        %1259 = vmatpush1.bf16.msra.mxu0 0
        %1260 = vmatprep.subr.bf16.mxu0 0
        %1261 = vmatpush1.bf16.msra.mxu0 0
        %1262 = vmatprep.subr.bf16.mxu0 0
        %1263 = vmatpush1.bf16.msra.mxu0 0
        %1264 = vmatprep.subr.bf16.mxu0 0
        %1265 = vmatpush1.bf16.msra.mxu0 0
        %1266 = vmatprep.subr.bf16.mxu0 0
        %1267 = vmatpush1.bf16.msra.mxu0 0
        %1268 = vmatprep.subr.bf16.mxu0 0
        %1269 = vmatpush1.bf16.msra.mxu0 0
        %1270 = vmatprep.subr.bf16.mxu0 0
        %1271 = vmatpush1.bf16.msra.mxu0 0
        %1272 = vmatprep.subr.bf16.mxu0 0
        %1273 = vmatpush1.bf16.msra.mxu0 0
        %1274 = vmatprep.subr.bf16.mxu0 0
        %1275 = vmatpush1.bf16.msra.mxu0 0
        %1276 = vmatprep.subr.bf16.mxu0 0
        %1277 = vmatpush1.bf16.msra.mxu0 0
        %1278 = vmatprep.subr.bf16.mxu0 0
        %1279 = vmatpush1.bf16.msra.mxu0 0
        %1280 = vmatprep.mubr.bf16.mxu0 0
        %1281 = vmatmul.mubr.bf16.gmra.mrb[0].mxu0 %v1243
        %v1282 = vpop.f32.mrb[0].mxu0
        %v1283 = vadd.f32 0.0, %v1282
        %v1284 = vpop.f32.mrb[0].mxu0
        %v1285 = vpop.f32.mrb[0].mxu0
        %v1286 = vadd.f32 0.0, %v1285
        %v1287 = vpop.f32.mrb[0].mxu0
        %1288 = vmatprep.mubr.bf16.mxu0 0
        %1289 = vmatmul.mubr.bf16.gmra.mrb[0].mxu0 %v1246
        %v1290 = vpop.f32.mrb[0].mxu0
        %v1291 = vadd.f32 0.0, %v1290
        %v1292 = vpop.f32.mrb[0].mxu0
        %v1293 = vpop.f32.mrb[0].mxu0
        %v1294 = vadd.f32 0.0, %v1293
        %v1295 = vpop.f32.mrb[0].mxu0
        %1296 = vdwg.mxu0
        %v1297 = vrcp.pop %v1161
        %v1298 = vrcp.pop %v1164
        %v1299 = vrcp.pop %v1167
        %v1300 = vrcp.pop %v1170
        %v1301 = vrcp.pop %v1173
        %v1302 = vrcp.pop %v1176
        %v1303 = vrcp.pop %v1179
        %v1304 = vrcp.pop %v1182
        %v1305 = vmul.f32 %v1228, %v1297
        %v1306 = vmul.f32 %v1231, %v1298
        %v1307 = vmul.f32 %v1236, %v1299
        %v1308 = vmul.f32 %v1239, %v1300
        %v1309 = vmul.f32 %v1283, %v1301
        %v1310 = vmul.f32 %v1286, %v1302
        %v1311 = vmul.f32 %v1291, %v1303
        %v1312 = vmul.f32 %v1294, %v1304
        %1313 = vst [vmem:[%s177] sm:$0xff] %v1305
        %1314 = vst [vmem:[%s177 + $0x8] sm:$0xff] %v1306
        %1315 = vst [vmem:[%s177 + $0x10] sm:$0xff] %v1307
        %1316 = vst [vmem:[%s177 + $0x18] sm:$0xff] %v1308
        %1317 = vst [vmem:[%s177 + $0x20] sm:$0xff] %v1309
        %1318 = vst [vmem:[%s177 + $0x28] sm:$0xff] %v1310
        %1319 = vst [vmem:[%s177 + $0x30] sm:$0xff] %v1311
        %1320 = vst [vmem:[%s177 + $0x38] sm:$0xff] %v1312
        %s1321 = sand.u32 %s75, 1
        %s1322 = scalar_lea.sflag [#allocation4], %s1321
        %s1323 = sand.u32 %s75, 1
        %s1324 = smul.addr %s1323, 64
        %s1325 = scalar_lea.vmem [#allocation7], %s1324
        // Predicated region
        $region37: #{tpu_custom_call.1} parent=27 // pred_check
          %p1326 = pneg %p85
        $region38: #{tpu_custom_call.1} parent=27 // pred_check_branch
          %1328 = sbr.rel (%p1326) target = $region40
        $region39: #{tpu_custom_call.1} parent=27 // pred_region
          %s1329 = smul.u32 2, %s20
          %s1331 = ssub.s32 1024, 1024
          %1332 = vsyncadd %s1322, %s1331
          %s1333 = smul.addr %s1329, 4
          %s1334 = smul.addr %s1333, 128
          %s1335 = scalar_lea.hbm %s2, %s1334
          %s1336 = sshll.u32 %s1325, 4
          %s1337 = int_to_ptr.vmem [resolvable:$true] %s1336
          %1342 = dma.vmem_to_hbm [thread:$0]  %s1337, 1024, %s1335, %s1322, 128, 128, 8
        $region40: #{tpu_custom_call.1} parent=27 // pred_fallthru
          _
      $region28: #{tpu_custom_call.1} parent=5 // pred_fallthru
        _
      %p1343 = scmp.le.s32.totalorder 2, %s15
      // Predicated region
      $region41: #{tpu_custom_call.1} parent=5 // pred_check
        %p1344 = pneg %p1343
      $region42: #{tpu_custom_call.1} parent=5 // pred_check_branch
        %1346 = sbr.rel (%p1344) target = $region44
      $region43: #{tpu_custom_call.1} parent=5 // pred_region
        %s1347 = ssub.s32 %s15, 2
        // Predicated region
        $region45: #{tpu_custom_call.1} parent=43 // pred_check
          %p1348 = pneg %p91
        $region46: #{tpu_custom_call.1} parent=43 // pred_check_branch
          %1350 = sbr.rel (%p1348) target = $region48
        $region47: #{tpu_custom_call.1} parent=43 // pred_region
          %s1351 = sand.u32 %s76, 1
          %s1352 = scalar_lea.sflag [#allocation4], %s1351
          %s1353 = sand.u32 %s76, 1
          %s1354 = smul.addr %s1353, 64
          %s1355 = scalar_lea.vmem [#allocation7], %s1354
          %1356 = dma.done %s1352, 1024
        $region48: #{tpu_custom_call.1} parent=43 // pred_fallthru
          _
      $region44: #{tpu_custom_call.1} parent=5 // pred_fallthru
        _
    $region6: #{tpu_custom_call.1} parent=1 // loop_footer
      %s19 = sadd.s32 1, %s15
    $region7: #{tpu_custom_call.1} parent=1 // loop_footer_branch
      %14 = sbr.rel target = $region3
    $region8: #{tpu_custom_call.1} parent=1 // loop_exit
      _
    %1357 = vsyncpa [#allocation3], 1
    %s1358 = scalar_lea.sflag [#allocation3], 1
    %1359 = vsyncpa %s1358, 1
    %1360 = vsyncpa [#allocation6], 1
    %1361 = vsyncpa [#allocation4], 1
    %s1362 = scalar_lea.sflag [#allocation4], 1
    %1363 = vsyncpa %s1362, 1

</llo_original>
